<compile_context>
chip_gen: v7x
topology: tpu7x:2x2x1
jax: 0.10.0
libtpu: 0.0.40
codegen_flags: <defaults>
</compile_context>

<pallas_src>
import functools
import math

import jax
import jax.numpy as jnp
from jax import lax
from jax.experimental import pallas as pl
from jax.experimental.pallas import tpu as pltpu

_LANE = 128
_SUBLANE = 8


def _num_tensorcores():
    """Best-effort TensorCore count (2 on v7x, 1 on v5e/v6e); 1 on failure."""
    try:
        info = pltpu.get_tpu_info()
        for attr in ("num_cores", "core_count", "num_tensorcores",
                     "tensorcore_count"):
            v = getattr(info, attr, None)
            if isinstance(v, int) and 1 <= v <= 8:
                return v
    except Exception:
        pass
    try:
        if "v7" in jax.devices()[0].device_kind.lower():
            return 2
    except Exception:
        pass
    return 1


def _pow_weight(one_minus_pt, gamma):
    """(1 - pt)**gamma; repeated multiplies for integer gamma (no EUP pow)."""
    g = float(gamma)
    if g.is_integer() and g >= 0.0:
        ig = int(g)
        if ig == 0:
            return jnp.ones_like(one_minus_pt)
        w = one_minus_pt
        for _ in range(ig - 1):
            w = w * one_minus_pt
        return w
    # TODO(synk): non-integer gamma falls back to pow (exp+log on EUP) and can
    # NaN for soft targets outside [0, 1].
    return jnp.power(one_minus_pt, g)


def _focal_loss_kernel(x_ref, t_ref, o_ref, *, gamma, m_full, nb, steps, tm,
                       lane):
    """Fold per-tile focal-loss terms into an (8, lane) resident accumulator.

    x_ref, t_ref: (tm, lane) VMEM tiles (logits, targets, native dtype).
    o_ref:        (8, lane) f32 per-core partial-sum block (resident across i).
    """
    c = pl.program_id(0)   # "parallel" core-split axis
    i = pl.program_id(1)   # "arbitrary" reduction axis

    @pl.when(i == 0)
    def _():
        o_ref[...] = jnp.zeros_like(o_ref)

    x = x_ref[...].astype(jnp.float32)
    t = t_ref[...].astype(jnp.float32)

    # One exp + one log (+ one approx-reciprocal) per element on the EUP.
    e = jnp.exp(-jnp.abs(x))
    log_term = jnp.log1p(e)
    r = pl.reciprocal(1.0 + e, approx=True)
    p = jnp.where(x >= 0.0, r, e * r)            # sigmoid(x), stable

    # 1 - pt computed directly (saves ~3 VALU ops/element vs building pt).
    one_minus_pt = p + t - 2.0 * (p * t)
    w = _pow_weight(one_minus_pt, gamma)

    # Stable BCE-with-logits: max(x,0) - x*t + log(1 + exp(-|x|)).
    bce = jnp.maximum(x, 0.0) - x * t + log_term
    vals = w * bce

    def accumulate(v):
        # (tm, lane) -> (8, lane) with vreg adds only; no per-step XLU reduce.
        o_ref[...] += jnp.sum(v.reshape(tm // _SUBLANE, _SUBLANE, lane), axis=0)

    blk = c * steps + i                          # intended (unclamped) block
    is_edge = blk >= nb - 1                      # last real block or duplicate

    @pl.when(jnp.logical_not(is_edge))
    def _():                                     # steady state: no masking
        accumulate(vals)

    @pl.when(is_edge)
    def _():
        # Mask (a) garbage rows of a partial last block and (b) clamped
        # duplicate blocks on the second core.  jnp.where is a select, so
        # NaN/Inf from garbage rows cannot leak through.
        grow = blk * tm + lax.broadcasted_iota(jnp.int32, (tm, lane), 0)
        accumulate(jnp.where(grow < m_full, vals, 0.0))


def _focal_terms(x, t, gamma):
    """Plain-JAX per-element focal terms (used only for the <128-elem tail)."""
    x = x.astype(jnp.float32)
    t = t.astype(jnp.float32)
    p = jax.nn.sigmoid(x)
    one_minus_pt = p + t - 2.0 * p * t
    w = one_minus_pt ** gamma
    bce = jnp.maximum(x, 0.0) - x * t + jnp.log1p(jnp.exp(-jnp.abs(x)))
    return w * bce


def focal_loss(logit, target, gamma=2, *, tm=None, num_cores=None):
    """Pallas TPU implementation of FocalLoss(gamma).forward(logit, target)."""
    assert logit.shape == target.shape, "logit/target must have the same shape"
    n = int(math.prod(logit.shape))
    lane = _LANE

    # Flatten row-major; native dtype passes through (upcast happens in-kernel).
    xf = jnp.ravel(logit)
    tf = jnp.ravel(target)

    m_full = n // lane                   # full lane-dense rows
    rem = n % lane                       # ragged tail length (<= 127)

    # Tail handled with the plain-JAX formula: at most 127 elements per stream,
    # so no O(N) pad/copy of the full inputs is ever required.
    tail_sum = jnp.float32(0.0)
    if rem:
        tail_sum = jnp.sum(_focal_terms(xf[m_full * lane:],
                                        tf[m_full * lane:], gamma))

    if m_full == 0:
        return tail_sum * (1.0 / n)

    if num_cores is None:
        num_cores = _num_tensorcores()   # 2 only on multi-TC chips (v7x)
    if tm is None:
        # v7x (multi-core, 3.2 TB/s HBM) wants bigger steps; 2 inputs x 2 bufs
        # x tm*128*4B stays well under the scoped-VMEM default either way.
        tm = 4096 if num_cores >= 2 else 2048

    # 128-aligned prefix of the streams.  When rem == 0 this is a free reshape;
    # when rem != 0 XLA may materialize one prefix copy (documented above).
    if rem:
        xf = xf[: m_full * lane]
        tf = tf[: m_full * lane]
    x2 = xf.reshape(m_full, lane)
    t2 = tf.reshape(m_full, lane)

    # Row tile: multiple of 8, capped at the 8-rounded row count so tiny inputs
    # don't burn compute on garbage rows.
    m_pad8 = ((m_full + _SUBLANE - 1) // _SUBLANE) * _SUBLANE
    tm = max(_SUBLANE, (min(int(tm), m_pad8) // _SUBLANE) * _SUBLANE)

    nb = pl.cdiv(m_full, tm)             # number of row blocks
    num_cores = max(1, min(int(num_cores), nb))
    steps = pl.cdiv(nb, num_cores)       # reduction steps per core

    kernel = functools.partial(
        _focal_loss_kernel,
        gamma=float(gamma), m_full=m_full, nb=nb, steps=steps, tm=tm, lane=lane)

    if num_cores == 1:
        def in_map(c, i):
            return (i, 0)
    else:
        def in_map(c, i):
            # Clamp overhanging block indices; the kernel zeroes duplicates.
            return (jnp.minimum(c * steps + i, nb - 1), 0)

    n_pref = m_full * lane
    itemsize = jnp.dtype(logit.dtype).itemsize
    cost = pl.CostEstimate(
        flops=25 * n_pref,
        transcendentals=3 * n_pref,
        bytes_accessed=2 * n_pref * itemsize + num_cores * _SUBLANE * lane * 4)

    partials = pl.pallas_call(
        kernel,
        out_shape=jax.ShapeDtypeStruct((num_cores * _SUBLANE, lane),
                                       jnp.float32),
        grid_spec=pltpu.PrefetchScalarGridSpec(
            num_scalar_prefetch=0,
            grid=(num_cores, steps),
            in_specs=[
                pl.BlockSpec((tm, lane), in_map),
                pl.BlockSpec((tm, lane), in_map),
            ],
            out_specs=pl.BlockSpec((_SUBLANE, lane), lambda c, i: (c, 0)),
        ),
        compiler_params=pltpu.CompilerParams(
            dimension_semantics=("parallel", "arbitrary")),
        cost_estimate=cost,
    )(x2, t2)

    # Single cross-core merge + cross-lane reduce + 1/n scale (tiny, XLA side).
    return (jnp.sum(partials) + tail_sum) * (1.0 / n)


def _focal_loss_ref(logit, target, gamma=2):
    """Pure-JAX reference mirroring the PyTorch module."""
    x = logit.astype(jnp.float32)
    t = target.astype(jnp.float32)
    p = jax.nn.sigmoid(x)
    pt = p * t + (1 - p) * (1 - t)
    w = (1 - pt) ** gamma
    bce = jnp.maximum(x, 0.0) - x * t + jnp.log1p(jnp.exp(-jnp.abs(x)))
    return jnp.mean(w * bce)


if __name__ == "__main__":
    key = jax.random.PRNGKey(0)
    k1, k2 = jax.random.split(key)

    # Small NCHW-shaped synthetic inputs consistent with typical focal-loss use.
    shape = (2, 4, 16, 16)
    logit = jax.random.normal(k1, shape, dtype=jnp.float32)
    target = jax.random.bernoulli(k2, p=0.3, shape=shape).astype(jnp.float32)

    loss = focal_loss(logit, target, gamma=2)
    loss = jax.block_until_ready(loss)

    ref = _focal_loss_ref(logit, target, gamma=2)
    # Slightly loose rtol: pl.reciprocal(approx=True) carries ~2^-12 rel error.
    assert jnp.allclose(loss, ref, rtol=5e-3, atol=1e-5), (loss, ref)

    print("KERNEL_OK")
</pallas_src>

<mosaic_0001>
module attributes {stable_mosaic.version = 11 : i64} {
  func.func @_focal_loss_kernel(%arg0: i32, %arg1: i32, %arg2: memref<16x128xf32, #tpu.memory_space<vmem>>, %arg3: memref<16x128xf32, #tpu.memory_space<vmem>>, %arg4: memref<8x128xf32, #tpu.memory_space<vmem>>) attributes {dimension_semantics = [#tpu.dimension_semantics<parallel>, #tpu.dimension_semantics<arbitrary>], iteration_bounds = array<i64: 1, 1>, scalar_prefetch = 0 : i64, scratch_operands = 0 : i64, tpu.core_type = #tpu.core_type<tc>, window_params = [{transform_indices = @transform_0, window_bounds = array<i64: 16, 128>}, {transform_indices = @transform_1, window_bounds = array<i64: 16, 128>}, {transform_indices = @transform_2, window_bounds = array<i64: 8, 128>}]} {
    %c0_i32 = arith.constant 0 : i32
    %0 = arith.cmpi eq, %arg1, %c0_i32 : i32
    %1 = arith.extui %0 : i1 to i32
    %c0_i32_0 = arith.constant 0 : i32
    %2 = arith.cmpi ne, %1, %c0_i32_0 : i32
    scf.if %2 {
      %cst_11 = arith.constant 0.000000e+00 : f32
      %37 = vector.broadcast %cst_11 : f32 to vector<8x128xf32>
      %c0_12 = arith.constant 0 : index
      %c0_13 = arith.constant 0 : index
      %38 = vector.load %arg4[%c0_12, %c0_13] : memref<8x128xf32, #tpu.memory_space<vmem>>, vector<8x128xf32>
      tpu.vector_store %arg4[%c0_12, %c0_13], %37 {strides = array<i32>} : memref<8x128xf32, #tpu.memory_space<vmem>>, vector<8x128xf32>,
    } else {
    }
    %c0 = arith.constant 0 : index
    %c0_1 = arith.constant 0 : index
    %3 = vector.load %arg2[%c0, %c0_1] : memref<16x128xf32, #tpu.memory_space<vmem>>, vector<16x128xf32>
    %c0_2 = arith.constant 0 : index
    %c0_3 = arith.constant 0 : index
    %4 = vector.load %arg3[%c0_2, %c0_3] : memref<16x128xf32, #tpu.memory_space<vmem>>, vector<16x128xf32>
    %5 = math.absf %3 : vector<16x128xf32>
    %cst = arith.constant 0.000000e+00 : f32
    %6 = vector.broadcast %cst : f32 to vector<16x128xf32>
    %7 = arith.subf %6, %5 : vector<16x128xf32>
    %8 = math.exp %7 : vector<16x128xf32>
    %9 = math.log1p %8 : vector<16x128xf32>
    %cst_4 = arith.constant 1.000000e+00 : f32
    %10 = vector.broadcast %cst_4 : f32 to vector<16x128xf32>
    %11 = arith.addf %10, %8 : vector<16x128xf32>
    %12 = tpu.reciprocal %11 {approx = true} : vector<16x128xf32> -> vector<16x128xf32>
    %cst_5 = arith.constant 0.000000e+00 : f32
    %13 = vector.broadcast %cst_5 : f32 to vector<16x128xf32>
    %14 = arith.cmpf oge, %3, %13 : vector<16x128xf32>
    %15 = arith.mulf %8, %12 : vector<16x128xf32>
    %16 = arith.select %14, %12, %15 : vector<16x128xi1>, vector<16x128xf32>
    %17 = arith.addf %16, %4 : vector<16x128xf32>
    %18 = arith.mulf %16, %4 : vector<16x128xf32>
    %cst_6 = arith.constant 2.000000e+00 : f32
    %19 = vector.broadcast %cst_6 : f32 to vector<16x128xf32>
    %20 = arith.mulf %19, %18 : vector<16x128xf32>
    %21 = arith.subf %17, %20 : vector<16x128xf32>
    %22 = arith.mulf %21, %21 : vector<16x128xf32>
    %cst_7 = arith.constant 0.000000e+00 : f32
    %23 = vector.broadcast %cst_7 : f32 to vector<16x128xf32>
    %24 = arith.maximumf %3, %23 : vector<16x128xf32>
    %25 = arith.mulf %3, %4 : vector<16x128xf32>
    %26 = arith.subf %24, %25 : vector<16x128xf32>
    %27 = arith.addf %26, %9 : vector<16x128xf32>
    %28 = arith.mulf %22, %27 : vector<16x128xf32>
    %c1_i32 = arith.constant 1 : i32
    %29 = arith.muli %arg0, %c1_i32 : i32
    %30 = arith.addi %29, %arg1 : i32
    %c0_i32_8 = arith.constant 0 : i32
    %31 = arith.cmpi sge, %30, %c0_i32_8 : i32
    %true = arith.constant true
    %32 = arith.xori %31, %true : i1
    %33 = arith.extui %32 : i1 to i32
    %c0_i32_9 = arith.constant 0 : i32
    %34 = arith.cmpi ne, %33, %c0_i32_9 : i32
    scf.if %34 {
      %c0_11 = arith.constant 0 : index
      %c0_12 = arith.constant 0 : index
      %37 = vector.load %arg4[%c0_11, %c0_12] : memref<8x128xf32, #tpu.memory_space<vmem>>, vector<8x128xf32>
      %38 = vector.shape_cast %28 : vector<16x128xf32> to vector<2x8x128xf32>
      %cst_13 = arith.constant dense<0.000000e+00> : vector<8x128xf32>
      %39 = vector.multi_reduction <add>, %38, %cst_13 [0] : vector<2x8x128xf32> to vector<8x128xf32>
      %40 = arith.addf %37, %39 : vector<8x128xf32>
      %c0_14 = arith.constant 0 : index
      %c0_15 = arith.constant 0 : index
      %41 = vector.load %arg4[%c0_14, %c0_15] : memref<8x128xf32, #tpu.memory_space<vmem>>, vector<8x128xf32>
      tpu.vector_store %arg4[%c0_14, %c0_15], %40 {strides = array<i32>} : memref<8x128xf32, #tpu.memory_space<vmem>>, vector<8x128xf32>,
    } else {
    }
    %35 = arith.extui %31 : i1 to i32
    %c0_i32_10 = arith.constant 0 : i32
    %36 = arith.cmpi ne, %35, %c0_i32_10 : i32
    scf.if %36 {
      %c16_i32 = arith.constant 16 : i32
      %37 = arith.muli %30, %c16_i32 : i32
      %38 = tpu.iota {dimensions = array<i32: 0>} : vector<16x128xi32>
      %39 = vector.broadcast %37 : i32 to vector<16x128xi32>
      %40 = arith.addi %39, %38 : vector<16x128xi32>
      %c16_i32_11 = arith.constant 16 : i32
      %41 = vector.broadcast %c16_i32_11 : i32 to vector<16x128xi32>
      %42 = arith.cmpi slt, %40, %41 : vector<16x128xi32>
      %cst_12 = arith.constant 0.000000e+00 : f32
      %43 = vector.broadcast %cst_12 : f32 to vector<16x128xf32>
      %44 = arith.select %42, %28, %43 : vector<16x128xi1>, vector<16x128xf32>
      %c0_13 = arith.constant 0 : index
      %c0_14 = arith.constant 0 : index
      %45 = vector.load %arg4[%c0_13, %c0_14] : memref<8x128xf32, #tpu.memory_space<vmem>>, vector<8x128xf32>
      %46 = vector.shape_cast %44 : vector<16x128xf32> to vector<2x8x128xf32>
      %cst_15 = arith.constant dense<0.000000e+00> : vector<8x128xf32>
      %47 = vector.multi_reduction <add>, %46, %cst_15 [0] : vector<2x8x128xf32> to vector<8x128xf32>
      %48 = arith.addf %45, %47 : vector<8x128xf32>
      %c0_16 = arith.constant 0 : index
      %c0_17 = arith.constant 0 : index
      %49 = vector.load %arg4[%c0_16, %c0_17] : memref<8x128xf32, #tpu.memory_space<vmem>>, vector<8x128xf32>
      tpu.vector_store %arg4[%c0_16, %c0_17], %48 {strides = array<i32>} : memref<8x128xf32, #tpu.memory_space<vmem>>, vector<8x128xf32>,
    } else {
    }
    return
  }
  func.func @transform_0(%arg0: i32, %arg1: i32) -> (i32, i32) {
    %c0_i32 = arith.constant 0 : i32
    %c0_i32_0 = arith.constant 0 : i32
    return %arg1, %c0_i32 : i32, i32
  }
  func.func @transform_1(%arg0: i32, %arg1: i32) -> (i32, i32) {
    %c0_i32 = arith.constant 0 : i32
    %c0_i32_0 = arith.constant 0 : i32
    return %arg1, %c0_i32 : i32, i32
  }
  func.func @transform_2(%arg0: i32, %arg1: i32) -> (i32, i32) {
    %c0_i32 = arith.constant 0 : i32
    %c0_i32_0 = arith.constant 0 : i32
    return %arg0, %c0_i32 : i32, i32
  }
}

</mosaic_0001>

<llo_original>
// kernel: tpu_custom_call.1
$region0: #{tpu_custom_call.1}
  #allocation0 [shape = 'u32[]', space=smem, size = 0x4, offset = 0x4, fixed_abs, tag = 'smem constant byte address 0x4 - core index']
  #allocation1 [shape = 'u32[144,128]{1,0:T(1,128)}', space=vmem, size = 0x12000, scoped, tag = 'internal scratch']
  %s0 = inlined_call_operand.hbm [shape: f32[16,128], index: 0, kind: input, shape index: {}]
  %s1 = inlined_call_operand.hbm [shape: f32[16,128], index: 1, kind: input, shape index: {}]
  %s2 = inlined_call_operand.hbm [shape: f32[8,128], index: 2, kind: output, shape index: {}]
  %s3 = sld [smem:[#allocation0]]
  $region38: #{tpu_custom_call.1} parent=0
    _
  %s5 = ssub.s32 1, %s3
  %s6 = scalar_select 0, %s5, %s3
  $region1: #{tpu_custom_call.1} parent=0
    #allocation2 [shape = 'u8[8192]{0}', space=vmem, size = 0x2000, scoped, tag = 'input window, operand 0, single buffered']
    #allocation3 [shape = 's32[1]{0}', space=sflag, size = 0x4, scoped, tag = 'scoped memory for tpu_custom_call.1']
    #allocation4 [shape = 's32[1]{0}', space=sflag, size = 0x4, scoped, tag = 'scoped memory for tpu_custom_call.1']
    #allocation5 [shape = 'u8[8192]{0}', space=vmem, size = 0x2000, scoped, tag = 'input window, operand 1, single buffered']
    #allocation6 [shape = 's32[1]{0}', space=sflag, size = 0x4, scoped, tag = 'scoped memory for tpu_custom_call.1']
    #allocation7 [shape = 'u8[4096]{0}', space=vmem, size = 0x1000, scoped, tag = 'output window, operand 0, single buffered']
    %7 = vsyncpa [#allocation3], 0
    %8 = vsyncpa [#allocation6], 0
    %9 = vsyncpa [#allocation4], 0
    // Predicated region
    $region2: #{tpu_custom_call.1} parent=1 // pred_check
      _
    $region3: #{tpu_custom_call.1} parent=1 // pred_check_branch
      %11 = sbr.rel (0) target = $region5
    $region4: #{tpu_custom_call.1} parent=1 // pred_region
      %s13 = ssub.s32 256, 256
      %14 = vsyncadd [#allocation3], %s13
      %s15 = sshll.u32 [#allocation2], 4
      %s16 = int_to_ptr.vmem [resolvable:$true] %s15
      %21 = dma.hbm_to_vmem [thread:$0]  %s0, 256, %s16, [#allocation3], 128, 128, 8
    $region5: #{tpu_custom_call.1} parent=1 // pred_fallthru
      _
    // Predicated region
    $region6: #{tpu_custom_call.1} parent=1 // pred_check
      _
    $region7: #{tpu_custom_call.1} parent=1 // pred_check_branch
      %23 = sbr.rel (0) target = $region9
    $region8: #{tpu_custom_call.1} parent=1 // pred_region
      %s25 = ssub.s32 256, 256
      %26 = vsyncadd [#allocation6], %s25
      %s27 = sshll.u32 [#allocation5], 4
      %s28 = int_to_ptr.vmem [resolvable:$true] %s27
      %33 = dma.hbm_to_vmem [thread:$0]  %s1, 256, %s28, [#allocation6], 128, 128, 8
    $region9: #{tpu_custom_call.1} parent=1 // pred_fallthru
      _
    // Predicated region
    $region10: #{tpu_custom_call.1} parent=1 // pred_check
      _
    $region11: #{tpu_custom_call.1} parent=1 // pred_check_branch
      %35 = sbr.rel (0) target = $region13
    $region12: #{tpu_custom_call.1} parent=1 // pred_region
      %36 = dma.done [#allocation3], 256
    $region13: #{tpu_custom_call.1} parent=1 // pred_fallthru
      _
    // Predicated region
    $region14: #{tpu_custom_call.1} parent=1 // pred_check
      _
    $region15: #{tpu_custom_call.1} parent=1 // pred_check_branch
      %38 = sbr.rel (0) target = $region17
    $region16: #{tpu_custom_call.1} parent=1 // pred_region
      %39 = dma.done [#allocation6], 256
    $region17: #{tpu_custom_call.1} parent=1 // pred_fallthru
      _
    %p40 = scmp.eq.s32.totalorder 0, 0
    // Predicated region
    $region18: #{tpu_custom_call.1} parent=1 // pred_check
      %p41 = pneg %p40
    $region19: #{tpu_custom_call.1} parent=1 // pred_check_branch
      %43 = sbr.rel (%p41) target = $region21
    $region20: #{tpu_custom_call.1} parent=1 // pred_region
      %44 = vst [vmem:[#allocation7] sm:$0xff] 0.0
    $region21: #{tpu_custom_call.1} parent=1 // pred_fallthru
      _
    %v45 = vld [vmem:[#allocation2] sm:$0xff]
    %v46 = vld [vmem:[#allocation2 + $0x8] sm:$0xff]
    %v47 = vld [vmem:[#allocation5] sm:$0xff]
    %v48 = vld [vmem:[#allocation5 + $0x8] sm:$0xff]
    %v49 = vand.u32 2147483647, %v45
    %v50 = vand.u32 2147483647, %v46
    %v51 = vsub.f32 0.0, %v49
    %v52 = vsub.f32 0.0, %v50
    %v53 = vmul.f32 %v51, 1.442695
    %v54 = vpow.pop %v53
    %v55 = vmul.f32 %v52, 1.442695
    %v56 = vpow.pop %v55
    %v57 = vadd.f32 %v54, 1.0
    %v58 = vlog2.pop %v57
    %v59 = vmul.f32 %v58, 0.6931472
    %v60 = vmul.f32 -0.5, %v54
    %v61 = vadd.f32 %v60, 1.0
    %v62 = vmul.f32 %v61, %v54
    %v63 = vand.u32 2147483647, %v54
    %vm64 = vcmp.lt.f32.partialorder %v63, 0.0004427343
    %v65 = vsel %vm64, %v62, %v59
    %v66 = vadd.f32 %v56, 1.0
    %v67 = vlog2.pop %v66
    %v68 = vmul.f32 %v67, 0.6931472
    %v69 = vmul.f32 -0.5, %v56
    %v70 = vadd.f32 %v69, 1.0
    %v71 = vmul.f32 %v70, %v56
    %v72 = vand.u32 2147483647, %v56
    %vm73 = vcmp.lt.f32.partialorder %v72, 0.0004427343
    %v74 = vsel %vm73, %v71, %v68
    %v75 = vadd.f32 %v54, 1.0
    %v76 = vadd.f32 %v56, 1.0
    %v77 = vrcp.pop %v75
    %v78 = vrcp.pop %v76
    %vm79 = vcmp.ge.f32.partialorder %v45, 0.0
    %vm80 = vcmp.ge.f32.partialorder %v46, 0.0
    %v81 = vmul.f32 %v54, %v77
    %v82 = vmul.f32 %v56, %v78
    %v83 = vsel %vm79, %v77, %v81
    %v84 = vsel %vm80, %v78, %v82
    %v85 = vadd.f32 %v83, %v47
    %v86 = vadd.f32 %v84, %v48
    %v87 = vmul.f32 %v83, %v47
    %v88 = vmul.f32 %v84, %v48
    %v89 = vmul.f32 %v87, 2.0
    %v90 = vmul.f32 %v88, 2.0
    %v91 = vsub.f32 %v85, %v89
    %v92 = vsub.f32 %v86, %v90
    %v93 = vmul.f32 %v91, %v91
    %v94 = vmul.f32 %v92, %v92
    %v95 = vmax.f32 %v45, 0.0
    %v96 = vmax.f32 %v46, 0.0
    %v97 = vmul.f32 %v45, %v47
    %v98 = vmul.f32 %v46, %v48
    %v99 = vsub.f32 %v95, %v97
    %v100 = vsub.f32 %v96, %v98
    %v101 = vadd.f32 %v99, %v65
    %v102 = vadd.f32 %v100, %v74
    %v103 = vmul.f32 %v93, %v101
    %v104 = vmul.f32 %v94, %v102
    %s105 = sadd.s32 0, 0
    %p106 = scmp.ge.s32.totalorder %s105, 0
    %p107 = scmp.lt.s32.totalorder %s105, 0
    // Predicated region
    $region22: #{tpu_custom_call.1} parent=1 // pred_check
      %p108 = pneg %p107
    $region23: #{tpu_custom_call.1} parent=1 // pred_check_branch
      %110 = sbr.rel (%p108) target = $region25
    $region24: #{tpu_custom_call.1} parent=1 // pred_region
      %v111 = vld [vmem:[#allocation7] sm:$0xff]
      %v112 = vadd.f32 %v103, %v104
      %v113 = vadd.f32 %v111, %v112
      %114 = vst [vmem:[#allocation7] sm:$0xff] %v113
    $region25: #{tpu_custom_call.1} parent=1 // pred_fallthru
      _
    // Predicated region
    $region26: #{tpu_custom_call.1} parent=1 // pred_check
      %p115 = pneg %p106
    $region27: #{tpu_custom_call.1} parent=1 // pred_check_branch
      %117 = sbr.rel (%p115) target = $region29
    $region28: #{tpu_custom_call.1} parent=1 // pred_region
      %s118 = smul.u32 %s105, 16
      %v119 = vlaneseq
      %v120 = vshrl.u32 %v119, 7
      %v121 = vadd.s32 %v120, 8
      %v122 = vstv %s118
      %v123 = vadd.s32 %v122, %v120
      %v124 = vadd.s32 %v122, %v121
      %vm125 = vcmp.lt.s32.totalorder %v123, 16
      %vm126 = vcmp.lt.s32.totalorder %v124, 16
      %v127 = vsel %vm125, %v103, 0.0
      %v128 = vsel %vm126, %v104, 0.0
      %v129 = vld [vmem:[#allocation7] sm:$0xff]
      %v130 = vadd.f32 %v127, %v128
      %v131 = vadd.f32 %v129, %v130
      %132 = vst [vmem:[#allocation7] sm:$0xff] %v131
    $region29: #{tpu_custom_call.1} parent=1 // pred_fallthru
      _
    // Predicated region
    $region30: #{tpu_custom_call.1} parent=1 // pred_check
      _
    $region31: #{tpu_custom_call.1} parent=1 // pred_check_branch
      %134 = sbr.rel (0) target = $region33
    $region32: #{tpu_custom_call.1} parent=1 // pred_region
      %s136 = ssub.s32 128, 128
      %137 = vsyncadd [#allocation4], %s136
      %s139 = sshll.u32 [#allocation7], 4
      %s140 = int_to_ptr.vmem [resolvable:$true] %s139
      %142 = dma.vmem_to_hbm [thread:$0]  %s140, 128, %s2, [#allocation4]
    $region33: #{tpu_custom_call.1} parent=1 // pred_fallthru
      _
    // Predicated region
    $region34: #{tpu_custom_call.1} parent=1 // pred_check
      _
    $region35: #{tpu_custom_call.1} parent=1 // pred_check_branch
      %144 = sbr.rel (0) target = $region37
    $region36: #{tpu_custom_call.1} parent=1 // pred_region
      %145 = dma.done [#allocation4], 128
    $region37: #{tpu_custom_call.1} parent=1 // pred_fallthru
      _
    %146 = vsyncpa [#allocation3], 1
    %147 = vsyncpa [#allocation6], 1
    %148 = vsyncpa [#allocation4], 1

</llo_original>
